<compile_context>
chip_gen: v7x
topology: tpu7x:2x2x1
jax: 0.10.0
libtpu: 0.0.40
codegen_flags: <defaults>
</compile_context>

<pallas_src>
import math

import jax
import jax.numpy as jnp
from jax.experimental import pallas as pl
from jax.experimental.pallas import tpu as pltpu


def _build_pe_table(d_model: int, max_len: int = 5000) -> jnp.ndarray:
    """Sinusoidal table identical to the PyTorch __init__ (plain JAX glue)."""
    position = jnp.arange(max_len, dtype=jnp.float32)[:, None]                 # [L, 1]
    div_term = jnp.exp(jnp.arange(0, d_model, 2, dtype=jnp.float32)
                       * (-math.log(10000.0) / d_model))                       # [D/2]
    pe = jnp.zeros((max_len, d_model), dtype=jnp.float32)
    pe = pe.at[:, 0::2].set(jnp.sin(position * div_term))
    pe = pe.at[:, 1::2].set(jnp.cos(position * div_term))
    return pe                                                                   # [L, D]


def _add_pe_kernel(x_ref, pe_ref, o_ref):
    # x_ref/o_ref: (R, C) or (R, T, D) block; pe_ref: (1, C) or (1, T, D),
    # broadcast over the row axis.
    o_ref[...] = x_ref[...] + pe_ref[...]


def _row_blocking(BN: int, row_bytes: int, sub: int, target_bytes: int) -> int:
    """Rows per block: multiple of `sub` (or == BN), ~target_bytes per block,
    aiming for an even number of grid steps >= 2 (for v7x's 2 TensorCores)."""
    if BN <= sub:
        return BN
    r = max(sub, (target_bytes // max(1, row_bytes)) // sub * sub)
    n = -(-BN // r)            # cdiv
    n = max(2, n)
    n += n % 2                 # even step count -> no 2-vs-1 TC imbalance
    R = -(-BN // n)
    R = -(-R // sub) * sub     # round up to sublane multiple
    R = min(R, max(sub, (BN // sub) * sub))
    return R


def temporal_positional_encoding(x: jnp.ndarray,
                                 pe_table: jnp.ndarray,
                                 *,
                                 target_bytes: int = 4 << 20,
                                 donate_x: bool = False) -> jnp.ndarray:
    """x: [B, N, T, D] -> [B, N, T, D], out = x + pe_table[:T] broadcast over (B, N)."""
    B, N, T, D = x.shape
    if T > pe_table.shape[0]:
        raise ValueError(f"time_steps T={T} exceeds pe_table max_len={pe_table.shape[0]}")

    dtype = x.dtype
    itemsize = jnp.dtype(dtype).itemsize
    sub = 8 * max(1, 4 // itemsize)          # sublane multiple: 8 f32, 16 bf16, 32 int8/fp8
    lane = 128
    BN = B * N
    TD = T * D

    pe = pe_table[:T, :].astype(dtype)       # [T, D]
    io_alias = {0: 0} if donate_x else {}

    if TD % lane == 0:
        # ---- lane-dense flattened path: [BN, TD] ----
        x_in = x.reshape(BN, TD)
        pe_in = pe.reshape(1, TD)
        row_bytes = TD * itemsize
        if row_bytes * sub <= target_bytes:
            R = _row_blocking(BN, row_bytes, sub, target_bytes)
            C = TD
        else:
            # Big rows: bound the block with a second (column) grid axis, lane-dense C.
            R = BN if BN <= sub else sub
            C = max(lane, (target_bytes // (max(1, R) * itemsize)) // lane * lane)
            C = min(C, TD)
        grid = (pl.cdiv(BN, R), pl.cdiv(TD, C))
        in_specs = [
            pl.BlockSpec((R, C), lambda i, j: (i, j)),
            pl.BlockSpec((1, C), lambda i, j: (0, j)),   # PE row: tiny, re-read per col block
        ]
        out_specs = pl.BlockSpec((R, C), lambda i, j: (i, j))
        semantics = ("parallel", "parallel")
        block_bytes = R * C * itemsize
        pe_bytes = C * itemsize
        out_shape = jax.ShapeDtypeStruct((BN, TD), dtype)
    else:
        # ---- fallback: keep (T, D) intact; full-dim last-two block dims are always
        # legal. Stores may be lane-masked when D % 128 != 0 (perf only, not correctness).
        x_in = x.reshape(BN, T, D)
        pe_in = pe.reshape(1, T, D)
        row_bytes = TD * itemsize
        R = _row_blocking(BN, row_bytes, sub, target_bytes)
        grid = (pl.cdiv(BN, R),)
        in_specs = [
            pl.BlockSpec((R, T, D), lambda i: (i, 0, 0)),
            pl.BlockSpec((1, T, D), lambda i: (0, 0, 0)),  # constant index -> resident PE
        ]
        out_specs = pl.BlockSpec((R, T, D), lambda i: (i, 0, 0))
        semantics = ("parallel",)
        block_bytes = R * T * D * itemsize
        pe_bytes = T * D * itemsize
        out_shape = jax.ShapeDtypeStruct((BN, T, D), dtype)

    # VMEM footprint: double-buffered x + out blocks, resident PE, plus slack.
    vmem_limit = int(min(64 << 20, max(8 << 20, 4 * block_bytes + 2 * pe_bytes + (2 << 20))))

    out = pl.pallas_call(
        _add_pe_kernel,
        out_shape=out_shape,
        grid_spec=pltpu.PrefetchScalarGridSpec(
            num_scalar_prefetch=0,
            grid=grid,
            in_specs=in_specs,
            out_specs=out_specs,
        ),
        compiler_params=pltpu.CompilerParams(
            dimension_semantics=semantics,
            vmem_limit_bytes=vmem_limit,
        ),
        input_output_aliases=io_alias,
    )(x_in, pe_in)
    return out.reshape(B, N, T, D)


if __name__ == "__main__":
    # Shapes consistent with forward: [batch, num_stations, time_steps, d_model]
    B, N, T, D = 2, 4, 8, 32
    max_len = 64  # >= T; same formula as default max_len=5000, just a smaller table

    key = jax.random.PRNGKey(0)
    x = jax.random.normal(key, (B, N, T, D), dtype=jnp.float32)
    pe_table = _build_pe_table(D, max_len)

    out = temporal_positional_encoding(x, pe_table)
    out = jax.block_until_ready(out)

    ref = x + pe_table[None, None, :T, :]
    assert out.shape == (B, N, T, D)
    assert jnp.allclose(out, ref, atol=1e-6), "mismatch vs reference (main path)"

    # Also exercise the non-lane-dense fallback path (T*D not a multiple of 128).
    D2 = 20
    key2 = jax.random.PRNGKey(1)
    x2 = jax.random.normal(key2, (B, N, T, D2), dtype=jnp.float32)
    pe_table2 = _build_pe_table(D2, max_len)
    out2 = jax.block_until_ready(temporal_positional_encoding(x2, pe_table2))
    ref2 = x2 + pe_table2[None, None, :T, :]
    assert jnp.allclose(out2, ref2, atol=1e-6), "mismatch vs reference (fallback path)"

    print("KERNEL_OK")
</pallas_src>

<mosaic_0001>
module attributes {stable_mosaic.version = 11 : i64} {
  func.func @_add_pe_kernel(%arg0: i32, %arg1: i32, %arg2: memref<8x256xf32, #tpu.memory_space<vmem>>, %arg3: memref<1x256xf32, #tpu.memory_space<vmem>>, %arg4: memref<8x256xf32, #tpu.memory_space<vmem>>) attributes {dimension_semantics = [#tpu.dimension_semantics<parallel>, #tpu.dimension_semantics<parallel>], iteration_bounds = array<i64: 1, 1>, scalar_prefetch = 0 : i64, scratch_operands = 0 : i64, tpu.core_type = #tpu.core_type<tc>, window_params = [{transform_indices = @transform_0, window_bounds = array<i64: 8, 256>}, {transform_indices = @transform_1, window_bounds = array<i64: 1, 256>}, {transform_indices = @transform_2, window_bounds = array<i64: 8, 256>}]} {
    %c0 = arith.constant 0 : index
    %c0_0 = arith.constant 0 : index
    %0 = vector.load %arg2[%c0, %c0_0] : memref<8x256xf32, #tpu.memory_space<vmem>>, vector<8x256xf32>
    %c0_1 = arith.constant 0 : index
    %c0_2 = arith.constant 0 : index
    %1 = vector.load %arg3[%c0_1, %c0_2] : memref<1x256xf32, #tpu.memory_space<vmem>>, vector<1x256xf32>
    %2 = vector.broadcast %1 : vector<1x256xf32> to vector<8x256xf32>
    %3 = arith.addf %0, %2 : vector<8x256xf32>
    %c0_3 = arith.constant 0 : index
    %c0_4 = arith.constant 0 : index
    %4 = vector.load %arg4[%c0_3, %c0_4] : memref<8x256xf32, #tpu.memory_space<vmem>>, vector<8x256xf32>
    tpu.vector_store %arg4[%c0_3, %c0_4], %3 {strides = array<i32>} : memref<8x256xf32, #tpu.memory_space<vmem>>, vector<8x256xf32>,
    return
  }
  func.func @transform_0(%arg0: i32, %arg1: i32) -> (i32, i32) {
    %c0_i32 = arith.constant 0 : i32
    return %arg0, %arg1 : i32, i32
  }
  func.func @transform_1(%arg0: i32, %arg1: i32) -> (i32, i32) {
    %c0_i32 = arith.constant 0 : i32
    %c0_i32_0 = arith.constant 0 : i32
    return %c0_i32, %arg1 : i32, i32
  }
  func.func @transform_2(%arg0: i32, %arg1: i32) -> (i32, i32) {
    %c0_i32 = arith.constant 0 : i32
    return %arg0, %arg1 : i32, i32
  }
}

</mosaic_0001>

<llo_original>
// kernel: tpu_custom_call.1
$region0: #{tpu_custom_call.1}
  #allocation0 [shape = 'u32[]', space=smem, size = 0x4, offset = 0x4, fixed_abs, tag = 'smem constant byte address 0x4 - core index']
  #allocation1 [shape = 'u32[144,128]{1,0:T(1,128)}', space=vmem, size = 0x12000, scoped, tag = 'internal scratch']
  %s0 = inlined_call_operand.hbm [shape: f32[8,256], index: 0, kind: input, shape index: {}]
  %s1 = inlined_call_operand.vmem [shape: f32[1,256], index: 1, kind: input, shape index: {}]
  %s2 = inlined_call_operand.hbm [shape: f32[8,256], index: 2, kind: output, shape index: {}]
  %s3 = sld [smem:[#allocation0]]
  $region22: #{tpu_custom_call.1} parent=0
    _
  %s5 = ssub.s32 1, %s3
  %s6 = scalar_select 0, %s5, %s3
  $region1: #{tpu_custom_call.1} parent=0
    #allocation2 [shape = 'u8[8192]{0}', space=vmem, size = 0x2000, scoped, tag = 'input window, operand 0, single buffered']
    #allocation3 [shape = 's32[1]{0}', space=sflag, size = 0x4, scoped, tag = 'scoped memory for tpu_custom_call.1']
    #allocation4 [shape = 's32[1]{0}', space=sflag, size = 0x4, scoped, tag = 'scoped memory for tpu_custom_call.1']
    #allocation5 [shape = 'u8[8192]{0}', space=vmem, size = 0x2000, scoped, tag = 'output window, operand 0, single buffered']
    %7 = vsyncpa [#allocation3], 0
    %8 = vsyncpa [#allocation4], 0
    // Predicated region
    $region2: #{tpu_custom_call.1} parent=1 // pred_check
      _
    $region3: #{tpu_custom_call.1} parent=1 // pred_check_branch
      %10 = sbr.rel (0) target = $region5
    $region4: #{tpu_custom_call.1} parent=1 // pred_region
      %s12 = ssub.s32 256, 256
      %13 = vsyncadd [#allocation3], %s12
      %s15 = sshll.u32 [#allocation2], 4
      %s16 = int_to_ptr.vmem [resolvable:$true] %s15
      %18 = dma.hbm_to_vmem [thread:$0]  %s0, 256, %s16, [#allocation3]
    $region5: #{tpu_custom_call.1} parent=1 // pred_fallthru
      _
    // Predicated region
    $region6: #{tpu_custom_call.1} parent=1 // pred_check
      _
    $region7: #{tpu_custom_call.1} parent=1 // pred_check_branch
      %20 = sbr.rel (0) target = $region9
    $region8: #{tpu_custom_call.1} parent=1 // pred_region
      _
    $region9: #{tpu_custom_call.1} parent=1 // pred_fallthru
      _
    // Predicated region
    $region10: #{tpu_custom_call.1} parent=1 // pred_check
      _
    $region11: #{tpu_custom_call.1} parent=1 // pred_check_branch
      %22 = sbr.rel (0) target = $region13
    $region12: #{tpu_custom_call.1} parent=1 // pred_region
      %23 = dma.done [#allocation3], 256
    $region13: #{tpu_custom_call.1} parent=1 // pred_fallthru
      _
    %v24 = vld [vmem:[#allocation2] sm:$0xff]
    %v25 = vld [vmem:[#allocation2 + $0x8] sm:$0xff]
    %v26 = vld [vmem:[%s1] sm:$0x3]
    %v28 = vlaneseq
    %v29 = vshrl.u32 %v28, 7
    %v30 = vsub.s32 0, %v29
    %v31 = vrot.slane %v26, %v30
    %v32 = vlaneseq
    %v33 = vshrl.u32 %v32, 7
    %v34 = vsub.s32 1, %v33
    %v35 = vrot.slane %v26, %v34
    %v38 = vadd.f32 %v24, %v31
    %v39 = vadd.f32 %v25, %v35
    %40 = vst [vmem:[#allocation5] sm:$0xff] %v38
    %41 = vst [vmem:[#allocation5 + $0x8] sm:$0xff] %v39
    // Predicated region
    $region14: #{tpu_custom_call.1} parent=1 // pred_check
      _
    $region15: #{tpu_custom_call.1} parent=1 // pred_check_branch
      %43 = sbr.rel (0) target = $region17
    $region16: #{tpu_custom_call.1} parent=1 // pred_region
      %s45 = ssub.s32 256, 256
      %46 = vsyncadd [#allocation4], %s45
      %s48 = sshll.u32 [#allocation5], 4
      %s49 = int_to_ptr.vmem [resolvable:$true] %s48
      %51 = dma.vmem_to_hbm [thread:$0]  %s49, 256, %s2, [#allocation4]
    $region17: #{tpu_custom_call.1} parent=1 // pred_fallthru
      _
    // Predicated region
    $region18: #{tpu_custom_call.1} parent=1 // pred_check
      _
    $region19: #{tpu_custom_call.1} parent=1 // pred_check_branch
      %53 = sbr.rel (0) target = $region21
    $region20: #{tpu_custom_call.1} parent=1 // pred_region
      %54 = dma.done [#allocation4], 256
    $region21: #{tpu_custom_call.1} parent=1 // pred_fallthru
      _
    %55 = vsyncpa [#allocation3], 1
    %56 = vsyncpa [#allocation4], 1

</llo_original>
